<compile_context>
chip_gen: v5e
topology: v5e:2x2
jax: 0.10.0
libtpu: 0.0.40
codegen_flags: <defaults>
</compile_context>

<pallas_src>
import functools
import inspect

import numpy as np
import jax
import jax.numpy as jnp
from jax.experimental import pallas as pl
from jax.experimental.pallas import tpu as pltpu


def _attention_kernel(enc_ref, hid_ref, w_enc_ref, w_hid_ref, b_ref, v_ref,
                      ctx_ref, w_ref, *, s_valid):
    BB, S, D2 = enc_ref.shape          # batch block, (padded) seq len, 2*hidden
    H = hid_ref.shape[1]

    # bf16 operands for the MXU; all accumulation stays f32.
    enc_bf = enc_ref[...].astype(jnp.bfloat16)          # (BB, S, 2H)
    hid_bf = hid_ref[...].astype(jnp.bfloat16)          # (BB, H)

    # Split concat-matmul: energy = tanh(enc @ W_enc + hid @ W_hid + b)
    # (the seq-repeat of `hidden` and the (B,S,3H) concat never materialize).
    gx = jnp.dot(enc_bf.reshape(BB * S, D2), w_enc_ref[...],
                 preferred_element_type=jnp.float32)                 # (BB*S, H)
    gh = jnp.dot(hid_bf, w_hid_ref[...],
                 preferred_element_type=jnp.float32) + b_ref[...]    # (BB, H)
    energy = jnp.tanh(gx.reshape(BB, S, H) + gh[:, None, :])         # (BB, S, H)

    # scores = energy . v -> (BB, S), lane-dense along S.
    scores = jnp.sum(energy * v_ref[...][None, :, :], axis=-1)       # (BB, S)

    if s_valid < S:   # static: sequence was padded up to a sublane multiple
        pos = jax.lax.broadcasted_iota(jnp.int32, (BB, S), 1)
        scores = jnp.where(pos < s_valid, scores, -1e30)

    # Softmax over the sequence axis; reciprocal runs on the EUP slot.
    m = jnp.max(scores, axis=-1, keepdims=True)
    e = jnp.exp(scores - m)
    w = e * pl.reciprocal(jnp.sum(e, axis=-1, keepdims=True), approx=True)
    w_ref[...] = w

    # context = sum_s w[b,s] * enc[b,s,:] — contract S on the MXU so no
    # (BB, S, 2H) f32 temporary is materialized on the VPU.
    ctx = jnp.einsum("bqs,bsd->bqd",
                     w[:, None, :].astype(jnp.bfloat16), enc_bf,
                     preferred_element_type=jnp.float32)             # (BB, 1, 2H)
    ctx_ref[...] = ctx[:, 0, :]


def _supports_pipeline_mode():
    try:
        return (hasattr(pl, "Buffered")
                and "pipeline_mode" in inspect.signature(pl.BlockSpec).parameters)
    except (TypeError, ValueError):
        return False


_HAS_PIPELINE_MODE = _supports_pipeline_mode()


def _const_spec(shape):
    """BlockSpec for grid-invariant operands (weights / bias / v).

    Their index_map is constant so they are never re-fetched; single-buffer them
    (when supported) so they don't burn 2x VMEM on a dead second buffer."""
    index_map = lambda i: (0,) * len(shape)
    if _HAS_PIPELINE_MODE:
        return pl.BlockSpec(shape, index_map, pipeline_mode=pl.Buffered(1))
    return pl.BlockSpec(shape, index_map)


def _pick_batch_block(B, S, D2, *, target_bytes=4 << 20):
    """Batch rows handled per grid step.

    Sized so the f32 encoder block is ~target_bytes (2-8 MiB keeps the HBM
    pipeline near roofline and gives the gx matmul a large M = BB*S), rounded to
    a multiple of 8 rows (sublane tile / output-layout rule) unless the whole
    batch fits in one block."""
    row_bytes = S * D2 * 4
    bb = max(1, target_bytes // max(row_bytes, 1))
    if bb >= B:
        # Whole batch fits. If it is big enough, still split into >=2 blocks so
        # the "parallel" grid axis can shard across v7x's two TensorCores.
        if B >= 16:
            half = -(-((B + 1) // 2) // 8) * 8
            return min(half, B)
        return B
    return min(max(8, (bb // 8) * 8), B)


def attention_forward(encoder_outputs, hidden, params, *, target_block_bytes=4 << 20):
    """encoder_outputs: (B, S, 2H) f32, hidden: (B, H) f32.
    Returns (context (B, 2H), attention_weights (B, S, 1)) — PyTorch semantics."""
    B, S, D2 = encoder_outputs.shape
    H = hidden.shape[-1]

    # Layout prep (wrapper-side, weights only): PyTorch Linear weight is
    # (out, in); pre-transpose, pre-split the [enc | hid] halves and cast the
    # matmul operands to bf16 for the MXU.
    w_att_t = params["w_att"].T                          # (3H, H)
    w_enc = w_att_t[:D2, :].astype(jnp.bfloat16)         # (2H, H)
    w_hid = w_att_t[D2:, :].astype(jnp.bfloat16)         # (H,  H)
    b_att = params["b_att"].reshape(1, H).astype(jnp.float32)
    v_row = params["w_v"].reshape(1, H).astype(jnp.float32)

    # Pad the sequence axis to a sublane multiple so in-kernel reshapes stay
    # free; padded positions are masked out of the softmax inside the kernel.
    S_pad = -(-S // 8) * 8
    if S_pad != S:
        encoder_outputs = jnp.pad(encoder_outputs, ((0, 0), (0, S_pad - S), (0, 0)))
    # TODO(synk): for H < 64 (D2 < 128) the lane dim is under-filled; realistic
    # model sizes (H >= 64) fill the vreg lanes.

    BB = _pick_batch_block(B, S_pad, D2, target_bytes=target_block_bytes)
    grid = (pl.cdiv(B, BB),)

    # Explicit VMEM budget: double-buffered activation blocks + (single-buffered)
    # constants + in-kernel temporaries, capped below v7x's 64 MiB/TC.
    act_blocks = BB * (S_pad * D2 + H + D2 + S_pad) * 4
    const_bytes = (D2 * H + H * H) * 2 + 2 * H * 4
    temp_bytes = 3 * BB * S_pad * H * 4 + BB * S_pad * D2 * 2
    est = 2 * act_blocks + 2 * const_bytes + temp_bytes
    vmem_limit = int(min(max(2 * est, 32 << 20), 48 << 20))

    cost = pl.CostEstimate(
        flops=(2 * B * S_pad * D2 * H + 2 * B * H * H
               + 2 * B * S_pad * H + 2 * B * S_pad * D2),
        transcendentals=B * S_pad * (H + 1),
        bytes_accessed=(B * S_pad * D2 * 4 + B * H * 4 + B * D2 * 4
                        + B * S_pad * 4 + const_bytes),
    )

    kernel = functools.partial(_attention_kernel, s_valid=S)

    ctx, w = pl.pallas_call(
        kernel,
        out_shape=(jax.ShapeDtypeStruct((B, D2), jnp.float32),
                   jax.ShapeDtypeStruct((B, S_pad), jnp.float32)),
        grid=grid,
        in_specs=[
            pl.BlockSpec((BB, S_pad, D2), lambda i: (i, 0, 0)),   # encoder outputs
            pl.BlockSpec((BB, H), lambda i: (i, 0)),              # decoder hidden
            _const_spec((D2, H)),                                 # W_enc (bf16)
            _const_spec((H, H)),                                  # W_hid (bf16)
            _const_spec((1, H)),                                  # bias  (f32)
            _const_spec((1, H)),                                  # v     (f32)
        ],
        out_specs=(pl.BlockSpec((BB, D2), lambda i: (i, 0)),
                   pl.BlockSpec((BB, S_pad), lambda i: (i, 0))),
        compiler_params=pltpu.CompilerParams(
            dimension_semantics=("parallel",),
            vmem_limit_bytes=vmem_limit),
        cost_estimate=cost,
    )(encoder_outputs, hidden, w_enc, w_hid, b_att, v_row)

    return ctx, w[:, :S].reshape(B, S, 1)


def init_params(key, hidden_size):
    """PyTorch nn.Linear default init: U(-1/sqrt(fan_in), 1/sqrt(fan_in))."""
    H = hidden_size
    k1, k2, k3 = jax.random.split(key, 3)
    b_att_bound = 1.0 / np.sqrt(3 * H)
    b_v_bound = 1.0 / np.sqrt(H)
    return {
        "w_att": jax.random.uniform(k1, (H, 3 * H), jnp.float32,
                                    -b_att_bound, b_att_bound),
        "b_att": jax.random.uniform(k2, (H,), jnp.float32,
                                    -b_att_bound, b_att_bound),
        "w_v": jax.random.uniform(k3, (1, H), jnp.float32,
                                  -b_v_bound, b_v_bound),
    }


def reference_forward(encoder_outputs, hidden, params):
    """Pure-JAX (f32) mirror of the PyTorch Attention.forward for validation."""
    B, S, _ = encoder_outputs.shape
    hid_rep = jnp.repeat(hidden[:, None, :], S, axis=1)
    combined = jnp.concatenate([encoder_outputs, hid_rep], axis=2)
    energy = jnp.tanh(combined @ params["w_att"].T + params["b_att"])
    scores = energy @ params["w_v"].T                 # (B, S, 1)
    weights = jax.nn.softmax(scores, axis=1)
    context = jnp.sum(weights * encoder_outputs, axis=1)
    return context, weights


if __name__ == "__main__":
    B, S, H = 2, 8, 32                     # batch, seq_len, hidden_size
    key = jax.random.PRNGKey(0)
    ke, kh, kp = jax.random.split(key, 3)
    encoder_outputs = jax.random.normal(ke, (B, S, 2 * H), jnp.float32)
    hidden = jax.random.normal(kh, (B, H), jnp.float32)
    params = init_params(kp, H)

    ctx, attn_w = jax.jit(attention_forward)(encoder_outputs, hidden, params)
    jax.block_until_ready((ctx, attn_w))

    ref_ctx, ref_w = reference_forward(encoder_outputs, hidden, params)
    assert ctx.shape == (B, 2 * H) and attn_w.shape == (B, S, 1)
    # bf16 MXU operands + approx reciprocal -> validate at ~1e-2 tolerances.
    np.testing.assert_allclose(np.asarray(attn_w), np.asarray(ref_w),
                               rtol=2e-2, atol=1e-2)
    np.testing.assert_allclose(np.asarray(ctx), np.asarray(ref_ctx),
                               rtol=2e-2, atol=2e-2)
    print("KERNEL_OK")
</pallas_src>

<mosaic_0001>
module attributes {stable_mosaic.version = 11 : i64} {
  func.func @_attention_kernel(%arg0: i32, %arg1: memref<2x8x64xf32, #tpu.memory_space<vmem>>, %arg2: memref<2x32xf32, #tpu.memory_space<vmem>>, %arg3: memref<64x32xbf16, #tpu.memory_space<vmem>>, %arg4: memref<32x32xbf16, #tpu.memory_space<vmem>>, %arg5: memref<1x32xf32, #tpu.memory_space<vmem>>, %arg6: memref<1x32xf32, #tpu.memory_space<vmem>>, %arg7: memref<2x64xf32, #tpu.memory_space<vmem>>, %arg8: memref<2x8xf32, #tpu.memory_space<vmem>>) attributes {dimension_semantics = [#tpu.dimension_semantics<parallel>], iteration_bounds = array<i64: 1>, scalar_prefetch = 0 : i64, scratch_operands = 0 : i64, tpu.core_type = #tpu.core_type<tc>, window_params = [{transform_indices = @transform_0, window_bounds = array<i64: 2, 8, 64>}, {transform_indices = @transform_1, window_bounds = array<i64: 2, 32>}, {pipeline_mode = #tpu.pipeline_mode<synchronous>, transform_indices = @transform_2, window_bounds = array<i64: 64, 32>}, {pipeline_mode = #tpu.pipeline_mode<synchronous>, transform_indices = @transform_3, window_bounds = array<i64: 32, 32>}, {pipeline_mode = #tpu.pipeline_mode<synchronous>, transform_indices = @transform_4, window_bounds = array<i64: 1, 32>}, {pipeline_mode = #tpu.pipeline_mode<synchronous>, transform_indices = @transform_5, window_bounds = array<i64: 1, 32>}, {transform_indices = @transform_6, window_bounds = array<i64: 2, 64>}, {transform_indices = @transform_7, window_bounds = array<i64: 2, 8>}]} {
    %c0 = arith.constant 0 : index
    %c0_0 = arith.constant 0 : index
    %c0_1 = arith.constant 0 : index
    %0 = vector.load %arg1[%c0, %c0_0, %c0_1] : memref<2x8x64xf32, #tpu.memory_space<vmem>>, vector<2x8x64xf32>
    %1 = arith.truncf %0 : vector<2x8x64xf32> to vector<2x8x64xbf16>
    %c0_2 = arith.constant 0 : index
    %c0_3 = arith.constant 0 : index
    %2 = vector.load %arg2[%c0_2, %c0_3] : memref<2x32xf32, #tpu.memory_space<vmem>>, vector<2x32xf32>
    %3 = arith.truncf %2 : vector<2x32xf32> to vector<2x32xbf16>
    %4 = vector.shape_cast %1 : vector<2x8x64xbf16> to vector<16x64xbf16>
    %c0_4 = arith.constant 0 : index
    %c0_5 = arith.constant 0 : index
    %5 = vector.load %arg3[%c0_4, %c0_5] : memref<64x32xbf16, #tpu.memory_space<vmem>>, vector<64x32xbf16>
    %cst = arith.constant dense<0.000000e+00> : vector<16x32xf32>
    %6 = tpu.matmul %4, %5, %cst {dimension_numbers = #tpu.dot_dimension_numbers<[1], [0], [0], [1], [0, 0, 1, 1], [], []>} : vector<16x64xbf16>, vector<64x32xbf16>, vector<16x32xf32> -> vector<16x32xf32>
    %c0_6 = arith.constant 0 : index
    %c0_7 = arith.constant 0 : index
    %7 = vector.load %arg4[%c0_6, %c0_7] : memref<32x32xbf16, #tpu.memory_space<vmem>>, vector<32x32xbf16>
    %cst_8 = arith.constant dense<0.000000e+00> : vector<2x32xf32>
    %8 = tpu.matmul %3, %7, %cst_8 {dimension_numbers = #tpu.dot_dimension_numbers<[1], [0], [0], [1], [0, 0, 1, 1], [], []>} : vector<2x32xbf16>, vector<32x32xbf16>, vector<2x32xf32> -> vector<2x32xf32>
    %c0_9 = arith.constant 0 : index
    %c0_10 = arith.constant 0 : index
    %9 = vector.load %arg5[%c0_9, %c0_10] : memref<1x32xf32, #tpu.memory_space<vmem>>, vector<1x32xf32>
    %10 = vector.broadcast %9 : vector<1x32xf32> to vector<2x32xf32>
    %11 = arith.addf %8, %10 : vector<2x32xf32>
    %12 = vector.shape_cast %6 : vector<16x32xf32> to vector<2x8x32xf32>
    %13 = vector.shape_cast %11 : vector<2x32xf32> to vector<2x1x32xf32>
    %14 = vector.broadcast %13 : vector<2x1x32xf32> to vector<2x8x32xf32>
    %15 = arith.addf %12, %14 : vector<2x8x32xf32>
    %16 = math.tanh %15 : vector<2x8x32xf32>
    %c0_11 = arith.constant 0 : index
    %c0_12 = arith.constant 0 : index
    %17 = vector.load %arg6[%c0_11, %c0_12] : memref<1x32xf32, #tpu.memory_space<vmem>>, vector<1x32xf32>
    %18 = vector.shape_cast %17 : vector<1x32xf32> to vector<1x1x32xf32>
    %19 = vector.broadcast %18 : vector<1x1x32xf32> to vector<2x8x32xf32>
    %20 = arith.mulf %16, %19 : vector<2x8x32xf32>
    %cst_13 = arith.constant dense<0.000000e+00> : vector<2x8xf32>
    %21 = vector.multi_reduction <add>, %20, %cst_13 [2] : vector<2x8x32xf32> to vector<2x8xf32>
    %cst_14 = arith.constant dense<0xFF800000> : vector<2xf32>
    %22 = vector.multi_reduction <maximumf>, %21, %cst_14 [1] : vector<2x8xf32> to vector<2xf32>
    %23 = vector.shape_cast %22 : vector<2xf32> to vector<2x1xf32>
    %24 = vector.broadcast %23 : vector<2x1xf32> to vector<2x8xf32>
    %25 = arith.subf %21, %24 : vector<2x8xf32>
    %26 = math.exp %25 : vector<2x8xf32>
    %cst_15 = arith.constant dense<0.000000e+00> : vector<2xf32>
    %27 = vector.multi_reduction <add>, %26, %cst_15 [1] : vector<2x8xf32> to vector<2xf32>
    %28 = vector.shape_cast %27 : vector<2xf32> to vector<2x1xf32>
    %29 = tpu.reciprocal %28 {approx = true} : vector<2x1xf32> -> vector<2x1xf32>
    %30 = vector.broadcast %29 : vector<2x1xf32> to vector<2x8xf32>
    %31 = arith.mulf %26, %30 : vector<2x8xf32>
    %c0_16 = arith.constant 0 : index
    %c0_17 = arith.constant 0 : index
    %32 = vector.load %arg8[%c0_16, %c0_17] : memref<2x8xf32, #tpu.memory_space<vmem>>, vector<2x8xf32>
    tpu.vector_store %arg8[%c0_16, %c0_17], %31 {strides = array<i32>} : memref<2x8xf32, #tpu.memory_space<vmem>>, vector<2x8xf32>,
    %33 = vector.shape_cast %31 : vector<2x8xf32> to vector<2x1x8xf32>
    %34 = arith.truncf %33 : vector<2x1x8xf32> to vector<2x1x8xbf16>
    "tpu.trace_start"() <{level = 10 : i32, message = "bqs,bsd->bqd"}> : () -> ()
    %cst_18 = arith.constant dense<0.000000e+00> : vector<2x1x64xf32>
    %35 = tpu.matmul %34, %1, %cst_18 {dimension_numbers = #tpu.dot_dimension_numbers<[2], [1], [1], [2], [0, 0, 0, 1, 1, 2], [0], [0]>} : vector<2x1x8xbf16>, vector<2x8x64xbf16>, vector<2x1x64xf32> -> vector<2x1x64xf32>
    "tpu.trace_stop"() : () -> ()
    %36 = vector.shape_cast %35 : vector<2x1x64xf32> to vector<2x64xf32>
    %c0_19 = arith.constant 0 : index
    %c0_20 = arith.constant 0 : index
    %37 = vector.load %arg7[%c0_19, %c0_20] : memref<2x64xf32, #tpu.memory_space<vmem>>, vector<2x64xf32>
    tpu.vector_store %arg7[%c0_19, %c0_20], %36 {strides = array<i32>} : memref<2x64xf32, #tpu.memory_space<vmem>>, vector<2x64xf32>,
    return
  }
  func.func @transform_0(%arg0: i32) -> (i32, i32, i32) {
    %c0_i32 = arith.constant 0 : i32
    %c0_i32_0 = arith.constant 0 : i32
    %c0_i32_1 = arith.constant 0 : i32
    return %arg0, %c0_i32, %c0_i32_0 : i32, i32, i32
  }
  func.func @transform_1(%arg0: i32) -> (i32, i32) {
    %c0_i32 = arith.constant 0 : i32
    %c0_i32_0 = arith.constant 0 : i32
    return %arg0, %c0_i32 : i32, i32
  }
  func.func @transform_2(%arg0: i32) -> (i32, i32) {
    %c0_i32 = arith.constant 0 : i32
    %c0_i32_0 = arith.constant 0 : i32
    %c0_i32_1 = arith.constant 0 : i32
    return %c0_i32, %c0_i32_0 : i32, i32
  }
  func.func @transform_3(%arg0: i32) -> (i32, i32) {
    %c0_i32 = arith.constant 0 : i32
    %c0_i32_0 = arith.constant 0 : i32
    %c0_i32_1 = arith.constant 0 : i32
    return %c0_i32, %c0_i32_0 : i32, i32
  }
  func.func @transform_4(%arg0: i32) -> (i32, i32) {
    %c0_i32 = arith.constant 0 : i32
    %c0_i32_0 = arith.constant 0 : i32
    %c0_i32_1 = arith.constant 0 : i32
    return %c0_i32, %c0_i32_0 : i32, i32
  }
  func.func @transform_5(%arg0: i32) -> (i32, i32) {
    %c0_i32 = arith.constant 0 : i32
    %c0_i32_0 = arith.constant 0 : i32
    %c0_i32_1 = arith.constant 0 : i32
    return %c0_i32, %c0_i32_0 : i32, i32
  }
  func.func @transform_6(%arg0: i32) -> (i32, i32) {
    %c0_i32 = arith.constant 0 : i32
    %c0_i32_0 = arith.constant 0 : i32
    return %arg0, %c0_i32 : i32, i32
  }
  func.func @transform_7(%arg0: i32) -> (i32, i32) {
    %c0_i32 = arith.constant 0 : i32
    %c0_i32_0 = arith.constant 0 : i32
    return %arg0, %c0_i32 : i32, i32
  }
}

</mosaic_0001>

<llo_original>
// kernel: attention_forward.1
$region0: #{attention_forward.1}
  #allocation0 [shape = 'u32[]', space=smem, size = 0x4, offset = 0x4, fixed_abs, tag = 'smem constant byte address 0x4 - core index']
  #allocation1 [shape = 'u32[72,128]{1,0:T(1,128)}', space=vmem, size = 0x9000, scoped, tag = 'internal scratch']
  %s0 = inlined_call_operand.vmem [shape: f32[2,8,64], index: 0, kind: input, shape index: {}]
  %s1 = inlined_call_operand.vmem [shape: f32[2,32], index: 1, kind: input, shape index: {}]
  %s2 = inlined_call_operand.vmem [shape: bf16[64,32], index: 2, kind: input, shape index: {}]
  %s3 = inlined_call_operand.vmem [shape: bf16[32,32], index: 3, kind: input, shape index: {}]
  %s4 = inlined_call_operand.vmem [shape: f32[1,32], index: 4, kind: input, shape index: {}]
  %s5 = inlined_call_operand.vmem [shape: f32[1,32], index: 5, kind: input, shape index: {}]
  %s6 = inlined_call_operand.hbm [shape: f32[2,64], index: 6, kind: output, shape index: {0}]
  %s7 = inlined_call_operand.hbm [shape: f32[2,8], index: 7, kind: output, shape index: {1}]
  %8 = xla_tuple %s6, %s7
  %s9 = sld [smem:[#allocation0]]
  $region42: #{attention_forward.1} parent=0
    _
  %s11 = ssub.s32 1, %s9
  %s12 = scalar_select 0, %s11, %s9
  $region1: #{attention_forward.1} parent=0
    #allocation2 [shape = 'u8[1024]{0}', space=vmem, size = 0x400, scoped, tag = 'output window, operand 0, single buffered']
    #allocation3 [shape = 's32[1]{0}', space=sflag, size = 0x4, scoped, tag = 'scoped memory for attention_forward.1']
    #allocation4 [shape = 'u8[1024]{0}', space=vmem, size = 0x400, scoped, tag = 'output window, operand 1, single buffered']
    #allocation5 [shape = 's32[1]{0}', space=sflag, size = 0x4, scoped, tag = 'scoped memory for attention_forward.1']
    %13 = vsyncpa [#allocation3], 0
    %14 = vsyncpa [#allocation5], 0
    // Predicated region
    $region2: #{attention_forward.1} parent=1 // pred_check
      _
    $region3: #{attention_forward.1} parent=1 // pred_check_branch
      %16 = sbr.rel (0) target = $region5
    $region4: #{attention_forward.1} parent=1 // pred_region
      _
    $region5: #{attention_forward.1} parent=1 // pred_fallthru
      _
    // Predicated region
    $region6: #{attention_forward.1} parent=1 // pred_check
      _
    $region7: #{attention_forward.1} parent=1 // pred_check_branch
      %18 = sbr.rel (0) target = $region9
    $region8: #{attention_forward.1} parent=1 // pred_region
      _
    $region9: #{attention_forward.1} parent=1 // pred_fallthru
      _
    // Predicated region
    $region10: #{attention_forward.1} parent=1 // pred_check
      _
    $region11: #{attention_forward.1} parent=1 // pred_check_branch
      %20 = sbr.rel (0) target = $region13
    $region12: #{attention_forward.1} parent=1 // pred_region
      _
    $region13: #{attention_forward.1} parent=1 // pred_fallthru
      _
    // Predicated region
    $region14: #{attention_forward.1} parent=1 // pred_check
      _
    $region15: #{attention_forward.1} parent=1 // pred_check_branch
      %22 = sbr.rel (0) target = $region17
    $region16: #{attention_forward.1} parent=1 // pred_region
      _
    $region17: #{attention_forward.1} parent=1 // pred_fallthru
      _
    // Predicated region
    $region18: #{attention_forward.1} parent=1 // pred_check
      _
    $region19: #{attention_forward.1} parent=1 // pred_check_branch
      %24 = sbr.rel (0) target = $region21
    $region20: #{attention_forward.1} parent=1 // pred_region
      _
    $region21: #{attention_forward.1} parent=1 // pred_fallthru
      _
    // Predicated region
    $region22: #{attention_forward.1} parent=1 // pred_check
      _
    $region23: #{attention_forward.1} parent=1 // pred_check_branch
      %26 = sbr.rel (0) target = $region25
    $region24: #{attention_forward.1} parent=1 // pred_region
      _
    $region25: #{attention_forward.1} parent=1 // pred_fallthru
      _
    %v28 = vld [vmem:[%s0] sm:$0xff]
    %v29 = vld [vmem:[%s0 + $0x8] sm:$0xff]
    %v30 = vpack.c.bf16 %v28, %v28
    %v31 = vpack.c.bf16 %v29, %v29
    %v32 = vld [vmem:[%s1] sm:$0x3]
    %v33 = vpack.c.bf16 %v32, %v32
    %v34 = vld [vmem:[%s2] sm:$0xf]
    %v35 = vld [vmem:[%s2 + $0x4] sm:$0xf]
    %v36 = vld [vmem:[%s2 + $0x8] sm:$0xf]
    %v37 = vld [vmem:[%s2 + $0xc] sm:$0xf]
    %v38 = vld [vmem:[%s2 + $0x10] sm:$0xf]
    %v39 = vld [vmem:[%s2 + $0x14] sm:$0xf]
    %v40 = vld [vmem:[%s2 + $0x18] sm:$0xf]
    %v41 = vld [vmem:[%s2 + $0x1c] sm:$0xf]
    %v44 = vunpack.c.l.b16 %v30
    %v45 = vunpack.c.l.b16 %v31
    %v46 = vpack.c.b16 %v45, %v44
    %v55 = vunpack.c.l.b16 %v34
    %v56 = vunpack.c.l.b16 %v35
    %v57 = vunpack.c.l.b16 %v36
    %v58 = vunpack.c.l.b16 %v37
    %v59 = vunpack.c.l.b16 %v38
    %v60 = vunpack.c.l.b16 %v39
    %v61 = vunpack.c.l.b16 %v40
    %v62 = vunpack.c.l.b16 %v41
    %v63 = vpack.c.b16 %v56, %v55
    %v64 = vpack.c.b16 %v58, %v57
    %v65 = vpack.c.b16 %v60, %v59
    %v66 = vpack.c.b16 %v62, %v61
    %vm71 = vcmask 523264
    %v73 = vsel %vm71, %v46, 0
    %75 = vmatpush.bf16.msra.mxu0 0
    %76 = vmatpush.bf16.msra.mxu0 0
    %77 = vmatpush.bf16.msra.mxu0 0
    %78 = vmatpush.bf16.msra.mxu0 0
    %79 = vmatpush.bf16.msra.mxu0 %v66
    %80 = vmatpush.bf16.msra.mxu0 %v65
    %81 = vmatpush.bf16.msra.mxu0 %v64
    %82 = vmatpush.bf16.msra.mxu0 %v63
    %83 = vmatmul.bf16.gmra.mxu0 %v73
    %v84 = vpop.f32.mrf.mxu0
    %v85 = vadd.f32 0.0, %v84
    %v86 = vpop.f32.mrf.mxu0
    %v87 = vadd.f32 0.0, %v86
    %88 = vdwg.mxu0
    %v89 = vld [vmem:[%s3] sm:$0xf]
    %v90 = vld [vmem:[%s3 + $0x4] sm:$0xf]
    %v91 = vld [vmem:[%s3 + $0x8] sm:$0xf]
    %v92 = vld [vmem:[%s3 + $0xc] sm:$0xf]
    %v93 = vld [vmem:[%s4] sm:$0x1]
    %v95 = vperm.slane %v93, 0
    %v101 = vunpack.c.l.b16 %v89
    %v102 = vunpack.c.l.b16 %v90
    %v103 = vunpack.c.l.b16 %v91
    %v104 = vunpack.c.l.b16 %v92
    %v105 = vpack.c.b16 %v102, %v101
    %v106 = vpack.c.b16 %v104, %v103
    %vm109 = vcmask 261120
    %v111 = vsel %vm109, %v33, 0
    %113 = vmatpush.bf16.msra.mxu0 0
    %114 = vmatpush.bf16.msra.mxu0 0
    %115 = vmatpush.bf16.msra.mxu0 0
    %116 = vmatpush.bf16.msra.mxu0 0
    %117 = vmatpush.bf16.msra.mxu0 0
    %118 = vmatpush.bf16.msra.mxu0 0
    %119 = vmatpush.bf16.msra.mxu0 %v106
    %120 = vmatpush.bf16.msra.mxu0 %v105
    %121 = vmatmul.bf16.gmra.mxu0 %v111
    %v122 = vpop.f32.mrf.mxu0
    %v123 = vadd.f32 %v95, %v122
    %v124 = vpop.f32.mrf.mxu0
    %125 = vdwg.mxu0
    %v127 = vrot.slane %v123, 1
    %v128 = vperm.slane %v123, 0
    %v129 = vperm.slane %v127, 0
    %v132 = vadd.f32 %v85, %v128
    %v133 = vadd.f32 %v87, %v129
    %v134 = vtanh.pop %v132
    %v135 = vtanh.pop %v133
    %v136 = vld [vmem:[%s5] sm:$0x1]
    %v138 = vperm.slane %v136, 0
    %v140 = vmul.f32 %v134, %v138
    %v141 = vmul.f32 %v135, %v138
    %v142 = vsel %vm109, %v140, 0.0
    %143 = vadd.xlane.f32.xlu0 %v142
    %v144 = vpop.xlane.xlu0 %143
    %v145 = vsel %vm109, %v141, 0.0
    %146 = vadd.xlane.f32.xlu0 %v145
    %v147 = vpop.xlane.xlu0 %146
    %v150 = vlaneseq
    %v151 = vand.u32 %v150, 127
    %v152 = vperm.slane %v144, %v151
    %v153 = vperm.slane %v147, %v151
    %vm154 = vcmask 1041409
    %v155 = vsel %vm154, %v153, %v152
    %vm157 = vcmask 58368
    %v158 = vsel %vm157, %v155, -inf
    %159 = vmax.xlane.f32.xlu0 %v158
    %v160 = vpop.xlane.xlu0 %159
    %v162 = vperm.slane %v160, 0
    %v163 = vperm.slane %v160, 1
    %v166 = vsub.f32 %v144, %v162
    %v167 = vsub.f32 %v147, %v163
    %v168 = vmul.f32 %v166, 1.442695
    %v169 = vpow.pop %v168
    %v170 = vmul.f32 %v167, 1.442695
    %v171 = vpow.pop %v170
    %174 = vset.pattern.permute.xlu0 0
    %175 = vperm.xlu0 %174, %v169
    %v176 = vpop.permute.xlu0 %175
    %177 = vset.pattern.permute.xlu0 0
    %178 = vperm.xlu0 %177, %v171
    %v179 = vpop.permute.xlu0 %178
    %v180 = vperm.slane %v176, %v151
    %v181 = vperm.slane %v179, %v151
    %v182 = vsel %vm154, %v181, %v180
    %v184 = vsel %vm157, %v182, 0.0
    %185 = vadd.xlane.f32.xlu0 %v184
    %v186 = vpop.xlane.xlu0 %185
    %v187 = vrcp.pop %v186
    %v189 = vperm.slane %v187, 0
    %v190 = vperm.slane %v187, 1
    %v193 = vmul.f32 %v169, %v189
    %v194 = vmul.f32 %v171, %v190
    %197 = vset.pattern.permute.xlu0 0
    %198 = vperm.xlu0 %197, %v193
    %v199 = vpop.permute.xlu0 %198
    %200 = vset.pattern.permute.xlu0 0
    %201 = vperm.xlu0 %200, %v194
    %v202 = vpop.permute.xlu0 %201
    %v203 = vperm.slane %v199, %v151
    %v204 = vperm.slane %v202, %v151
    %v205 = vsel %vm154, %v204, %v203
    %207 = vst.msk [vmem:[#allocation4] sm:$0x3] %vm157, %v205
    %v208 = vpack.c.bf16 %v193, %v193
    %v209 = vpack.c.bf16 %v194, %v194
    %v211 = vunpack.c.l.b16 %v208
    %v212 = vpack.c.b16 %v211, %v211
    %v213 = vunpack.c.l.b16 %v212
    %214 = vset.pattern.permute.xlu0 0
    %215 = vperm.xlu0 %214, %v213
    %v216 = vpop.permute.xlu0 %215
    %v217 = vperm.slane %v216, %v151
    %v218 = vpack.c.b16 %v217, %v217
    %vm219 = vcmask 64512
    %v221 = vsel %vm219, %v218, 0
    %vm223 = vcmask 1043456
    %v225 = vsel %vm223, %v30, 0
    %227 = vmatpush.bf16.msra.mxu0 0
    %228 = vmatpush.bf16.msra.mxu0 0
    %229 = vmatpush.bf16.msra.mxu0 0
    %230 = vmatpush.bf16.msra.mxu0 0
    %231 = vmatpush.bf16.msra.mxu0 0
    %232 = vmatpush.bf16.msra.mxu0 0
    %233 = vmatpush.bf16.msra.mxu0 0
    %234 = vmatpush.bf16.msra.mxu0 %v225
    %235 = vmatmul.bf16.gmra.mxu0 %v221
    %v236 = vpop.f32.mrf.mxu0
    %v237 = vadd.f32 0.0, %v236
    %v238 = vpop.f32.mrf.mxu0
    %239 = vdwg.mxu0
    %v241 = vunpack.c.l.b16 %v209
    %v242 = vpack.c.b16 %v241, %v241
    %v243 = vunpack.c.l.b16 %v242
    %244 = vset.pattern.permute.xlu0 0
    %245 = vperm.xlu0 %244, %v243
    %v246 = vpop.permute.xlu0 %245
    %v247 = vperm.slane %v246, %v151
    %v248 = vpack.c.b16 %v247, %v247
    %v250 = vsel %vm219, %v248, 0
    %v253 = vsel %vm223, %v31, 0
    %255 = vmatpush.bf16.msra.mxu0 0
    %256 = vmatpush.bf16.msra.mxu0 0
    %257 = vmatpush.bf16.msra.mxu0 0
    %258 = vmatpush.bf16.msra.mxu0 0
    %259 = vmatpush.bf16.msra.mxu0 0
    %260 = vmatpush.bf16.msra.mxu0 0
    %261 = vmatpush.bf16.msra.mxu0 0
    %262 = vmatpush.bf16.msra.mxu0 %v253
    %263 = vmatmul.bf16.gmra.mxu0 %v250
    %v264 = vpop.f32.mrf.mxu0
    %v265 = vadd.f32 0.0, %v264
    %v266 = vpop.f32.mrf.mxu0
    %267 = vdwg.mxu0
    %v270 = vrot.slane %v265, 7
    %v271 = vsel %vm154, %v270, %v237
    %vm273 = vcmask 517120
    %274 = vst.msk [vmem:[#allocation2] sm:$0x3] %vm273, %v271
    // Predicated region
    $region26: #{attention_forward.1} parent=1 // pred_check
      _
    $region27: #{attention_forward.1} parent=1 // pred_check_branch
      %276 = sbr.rel (0) target = $region29
    $region28: #{attention_forward.1} parent=1 // pred_region
      %278 = vsyncadd [#allocation3], 0
      %s280 = sshll.u32 [#allocation2], 4
      %s281 = int_to_ptr.vmem [resolvable:$true] %s280
      %s282 = sshll.u32 %s6, 4
      %s283 = int_to_ptr.hbm [resolvable:$true] %s282
      %285 = dma.vmem_to_hbm [thread:$0]  %s281, 32, %s283, [#allocation3]
    $region29: #{attention_forward.1} parent=1 // pred_fallthru
      _
    // Predicated region
    $region30: #{attention_forward.1} parent=1 // pred_check
      _
    $region31: #{attention_forward.1} parent=1 // pred_check_branch
      %287 = sbr.rel (0) target = $region33
    $region32: #{attention_forward.1} parent=1 // pred_region
      %289 = vsyncadd [#allocation5], 0
      %s291 = sshll.u32 [#allocation4], 4
      %s292 = int_to_ptr.vmem [resolvable:$true] %s291
      %s293 = sshll.u32 %s7, 4
      %s294 = int_to_ptr.hbm [resolvable:$true] %s293
      %296 = dma.vmem_to_hbm [thread:$0]  %s292, 32, %s294, [#allocation5]
    $region33: #{attention_forward.1} parent=1 // pred_fallthru
      _
    // Predicated region
    $region34: #{attention_forward.1} parent=1 // pred_check
      _
    $region35: #{attention_forward.1} parent=1 // pred_check_branch
      %298 = sbr.rel (0) target = $region37
    $region36: #{attention_forward.1} parent=1 // pred_region
      %300 = dma.done [#allocation3], 32
    $region37: #{attention_forward.1} parent=1 // pred_fallthru
      _
    // Predicated region
    $region38: #{attention_forward.1} parent=1 // pred_check
      _
    $region39: #{attention_forward.1} parent=1 // pred_check_branch
      %302 = sbr.rel (0) target = $region41
    $region40: #{attention_forward.1} parent=1 // pred_region
      %304 = dma.done [#allocation5], 32
    $region41: #{attention_forward.1} parent=1 // pred_fallthru
      _
    %305 = vsyncpa [#allocation3], 1
    %306 = vsyncpa [#allocation5], 1

</llo_original>
